<compile_context>
chip_gen: v7x
topology: tpu7x:2x2x1
jax: 0.10.0
libtpu: 0.0.40
codegen_flags: <defaults>
</compile_context>

<pallas_src>
import functools

import jax
import jax.numpy as jnp
import numpy as np
from jax import lax
from jax.experimental import pallas as pl
from jax.experimental.pallas import tpu as pltpu


def _pick_tile(total, target):
    """Largest multiple-of-8 divisor of `total` that is <= target, else `total`."""
    if total <= target:
        return total
    t = (min(target, total) // 8) * 8
    while t >= 8:
        if total % t == 0:
            return t
        t -= 8
    return total


def _default_tiles():
    """(row_tile, q_tile) defaults tuned per TPU generation."""
    kind = ""
    try:
        kind = jax.devices()[0].device_kind.lower()
    except Exception:
        pass
    small_mxu = any(t in kind for t in ("v2", "v3", "v4", "v5 lite", "v5e", "v5lite"))
    return (256, 128) if small_mxu else (512, 256)


def _vmem_limit(working_set_bytes):
    """Generation-aware VMEM budget: ~75% of physical capacity, floored at 32 MiB."""
    cap = 128 * 1024 * 1024
    try:
        cap = int(getattr(pltpu.get_tpu_info(), "vmem_capacity_bytes", cap))
    except Exception:
        pass
    budget = int(0.75 * cap)                     # ~48 MiB on v7x, ~96 MiB on v5e/v6e
    return int(min(max(2 * working_set_bytes, 32 * 1024 * 1024), budget))


# --------------------------------------------------------------------------- #
# Kernel 1: K/V projection, emitted head-major (B, H, N, hd).
# --------------------------------------------------------------------------- #
def _kv_proj_kernel(x_ref, wk_ref, wv_ref, bk_ref, bv_ref, k_ref, v_ref, *, num_heads):
    x = x_ref[...]                                           # (tn, C)

    def head_body(h, carry):
        kh = jnp.dot(x, wk_ref[h], preferred_element_type=jnp.float32) + bk_ref[h]
        vh = jnp.dot(x, wv_ref[h], preferred_element_type=jnp.float32) + bv_ref[h]
        k_ref[h] = kh.astype(k_ref.dtype)                    # (tn, hd) head-major store
        v_ref[h] = vh.astype(v_ref.dtype)
        return carry

    lax.fori_loop(0, num_heads, head_body, 0)


# --------------------------------------------------------------------------- #
# Kernel 2: fused Q projection + attention + output projection per (b, q-tile).
# --------------------------------------------------------------------------- #
def _attn_kernel(x_ref, k_ref, v_ref, wq_ref, bq_ref, wp_ref, bp_ref, o_ref, *, num_heads):
    tq, C = x_ref.shape
    cdtype = x_ref.dtype
    xq = x_ref[...]                                          # (tq, C)

    def head_body(h, acc):
        # Fused Q projection (scale already folded into wq/bq); full-C contraction.
        qh = (jnp.dot(xq, wq_ref[h], preferred_element_type=jnp.float32)
              + bq_ref[h]).astype(cdtype)                    # (tq, hd)
        # QK^T without materializing K^T: contract last dims of both operands.
        s = lax.dot_general(qh, k_ref[h], (((1,), (1,)), ((), ())),
                            preferred_element_type=jnp.float32)      # (tq, N) f32
        m = jnp.max(s, axis=-1, keepdims=True)
        p = jnp.exp(s - m)
        l = jnp.sum(p, axis=-1, keepdims=True)               # (tq, 1)
        pv = jnp.dot(p.astype(cdtype), v_ref[h],
                     preferred_element_type=jnp.float32)     # (tq, hd) f32
        pv = pv / l                                          # exact normalization
        # Per-head slice of the output projection, accumulated into (tq, C) f32.
        return acc + jnp.dot(pv.astype(cdtype), wp_ref[h],
                             preferred_element_type=jnp.float32)

    acc = lax.fori_loop(0, num_heads, head_body,
                        jnp.zeros((tq, C), jnp.float32))
    o_ref[...] = (acc + bp_ref[...]).astype(o_ref.dtype)


def self_attention(x, w_qkv, b_qkv, w_proj, b_proj, *, num_heads,
                   row_tile=None, q_tile=None, single_buffer_resident=True):
    B, N, C = x.shape
    H = num_heads
    hd = C // H
    assert hd * H == C, "embed_dim must be divisible by num_heads"
    scale = float(hd) ** -0.5
    cdtype = x.dtype
    isz = jnp.dtype(cdtype).itemsize

    if row_tile is None or q_tile is None:
        drt, dqt = _default_tiles()
        row_tile = row_tile or drt
        q_tile = q_tile or dqt

    def _resident_spec(block_shape, index_map):
        # Single-buffer blocks whose index map is constant along the inner grid
        # axes (weights / biases / per-batch K,V): halves their VMEM footprint.
        if single_buffer_resident:
            try:
                return pl.BlockSpec(block_shape, index_map,
                                    pipeline_mode=pl.Buffered(1))
            except TypeError:
                pass
        return pl.BlockSpec(block_shape, index_map)

    # ---- host-side weight prep: pre-transposed, split per head, scale folded ----
    # PyTorch Linear: out = x @ W.T + b, with QKV output columns ordered
    # (q|k|v) x (head) x (dim-within-head).
    def _split_heads(w_rows):                     # w_rows: (C_out=C, C_in=C)
        return jnp.transpose(w_rows).reshape(C, H, hd).transpose(1, 0, 2)  # (H, C, hd)

    wq_h = (_split_heads(w_qkv[0:C, :]) * scale).astype(cdtype)
    wk_h = _split_heads(w_qkv[C:2 * C, :]).astype(cdtype)
    wv_h = _split_heads(w_qkv[2 * C:3 * C, :]).astype(cdtype)
    bq_h = (b_qkv[0:C] * scale).reshape(H, 1, hd).astype(jnp.float32)
    bk_h = b_qkv[C:2 * C].reshape(H, 1, hd).astype(jnp.float32)
    bv_h = b_qkv[2 * C:3 * C].reshape(H, 1, hd).astype(jnp.float32)
    wp_h = jnp.transpose(w_proj).reshape(H, hd, C).astype(cdtype)   # (H, hd, C)
    bp2 = b_proj.reshape(1, C).astype(jnp.float32)

    # ---------------- Kernel 1: head-major K/V projection ----------------
    tn = _pick_tile(N, row_tile)
    ws1 = (2 * tn * C * isz                      # x tile (double-buffered)
           + 2 * C * C * isz                     # Wk + Wv (single-buffered)
           + 4 * tn * C * isz                    # K, V output tiles (double-buffered)
           + 4 * tn * hd * 4)                    # f32 per-head intermediates
    k_hm, v_hm = pl.pallas_call(
        functools.partial(_kv_proj_kernel, num_heads=H),
        out_shape=(jax.ShapeDtypeStruct((B, H, N, hd), cdtype),
                   jax.ShapeDtypeStruct((B, H, N, hd), cdtype)),
        grid_spec=pltpu.PrefetchScalarGridSpec(
            num_scalar_prefetch=0,
            grid=(B, N // tn),
            in_specs=[
                pl.BlockSpec((None, tn, C), lambda b, i: (b, i, 0)),      # x rows
                _resident_spec((H, C, hd), lambda b, i: (0, 0, 0)),       # Wk (per head)
                _resident_spec((H, C, hd), lambda b, i: (0, 0, 0)),       # Wv (per head)
                _resident_spec((H, 1, hd), lambda b, i: (0, 0, 0)),       # bk
                _resident_spec((H, 1, hd), lambda b, i: (0, 0, 0)),       # bv
            ],
            out_specs=(pl.BlockSpec((None, H, tn, hd), lambda b, i: (b, 0, i, 0)),
                       pl.BlockSpec((None, H, tn, hd), lambda b, i: (b, 0, i, 0))),
        ),
        compiler_params=pltpu.CompilerParams(
            dimension_semantics=("parallel", "parallel"),
            vmem_limit_bytes=_vmem_limit(ws1)),
    )(x, wk_h, wv_h, bk_h, bv_h)

    # -------- Kernel 2: fused Q proj + attention + output projection --------
    tq = _pick_tile(N, q_tile)
    ws2 = (2 * tq * C * isz                      # x tile (double-buffered)
           + 2 * N * C * isz                     # K + V resident (single-buffered)
           + 2 * C * C * isz                     # Wq + Wproj resident
           + 2 * tq * C * isz                    # output tile
           + tq * C * 4                          # f32 accumulator carry
           + 3 * tq * N * 4)                     # per-head score / exp / cast copy
    out = pl.pallas_call(
        functools.partial(_attn_kernel, num_heads=H),
        out_shape=jax.ShapeDtypeStruct((B, N, C), cdtype),
        grid_spec=pltpu.PrefetchScalarGridSpec(
            num_scalar_prefetch=0,
            grid=(B, N // tq),
            in_specs=[
                pl.BlockSpec((None, tq, C), lambda b, i: (b, i, 0)),          # x rows
                _resident_spec((None, H, N, hd), lambda b, i: (b, 0, 0, 0)),  # K (per b)
                _resident_spec((None, H, N, hd), lambda b, i: (b, 0, 0, 0)),  # V (per b)
                _resident_spec((H, C, hd), lambda b, i: (0, 0, 0)),           # Wq (scaled)
                _resident_spec((H, 1, hd), lambda b, i: (0, 0, 0)),           # bq (scaled)
                _resident_spec((H, hd, C), lambda b, i: (0, 0, 0)),           # Wproj per head
                _resident_spec((1, C), lambda b, i: (0, 0)),                  # bproj
            ],
            out_specs=pl.BlockSpec((None, tq, C), lambda b, i: (b, i, 0)),
        ),
        compiler_params=pltpu.CompilerParams(
            dimension_semantics=("parallel", "parallel"),
            vmem_limit_bytes=_vmem_limit(ws2)),
    )(x, k_hm, v_hm, wq_h, bq_h, wp_h, bp2)
    return out


def _reference(x, w_qkv, b_qkv, w_proj, b_proj, num_heads):
    B, N, C = x.shape
    hd = C // num_heads
    qkv = x @ w_qkv.T + b_qkv                                 # (B, N, 3C)
    qkv = qkv.reshape(B, N, 3, num_heads, hd).transpose(2, 0, 3, 1, 4)
    q, k, v = qkv[0], qkv[1], qkv[2]                          # (B, H, N, hd)
    attn = (q @ jnp.swapaxes(k, -2, -1)) * (hd ** -0.5)
    attn = jax.nn.softmax(attn, axis=-1)
    o = (attn @ v).transpose(0, 2, 1, 3).reshape(B, N, C)
    return o @ w_proj.T + b_proj


if __name__ == "__main__":
    B, N, C = 2, 8, 32
    num_heads = 4

    key = jax.random.PRNGKey(0)
    kx, k1, k2, k3, k4 = jax.random.split(key, 5)

    # Deterministic parameter init (PyTorch Linear default: U(-1/sqrt(in), 1/sqrt(in))).
    bound = 1.0 / np.sqrt(C)
    x = jax.random.normal(kx, (B, N, C), dtype=jnp.float32)
    w_qkv = jax.random.uniform(k1, (3 * C, C), jnp.float32, -bound, bound)
    b_qkv = jax.random.uniform(k2, (3 * C,), jnp.float32, -bound, bound)
    w_proj = jax.random.uniform(k3, (C, C), jnp.float32, -bound, bound)
    b_proj = jax.random.uniform(k4, (C,), jnp.float32, -bound, bound)

    try:
        out = self_attention(x, w_qkv, b_qkv, w_proj, b_proj, num_heads=num_heads)
        out = jax.block_until_ready(out)
    except Exception:
        # Fallback if this jax version rejects single-buffered (pl.Buffered(1))
        # resident blocks at lowering time: retry with default double-buffering.
        out = self_attention(x, w_qkv, b_qkv, w_proj, b_proj, num_heads=num_heads,
                             single_buffer_resident=False)
        out = jax.block_until_ready(out)

    ref = _reference(x, w_qkv, b_qkv, w_proj, b_proj, num_heads)
    np.testing.assert_allclose(np.asarray(out), np.asarray(ref), rtol=2e-3, atol=2e-3)

    print("KERNEL_OK")
</pallas_src>

<mosaic_0001>
module attributes {stable_mosaic.version = 11 : i64} {
  func.func @_kv_proj_kernel(%arg0: i32, %arg1: i32, %arg2: memref<1x8x32xf32, #tpu.memory_space<vmem>>, %arg3: memref<4x32x8xf32, #tpu.memory_space<vmem>>, %arg4: memref<4x32x8xf32, #tpu.memory_space<vmem>>, %arg5: memref<4x1x8xf32, #tpu.memory_space<vmem>>, %arg6: memref<4x1x8xf32, #tpu.memory_space<vmem>>, %arg7: memref<1x4x8x8xf32, #tpu.memory_space<vmem>>, %arg8: memref<1x4x8x8xf32, #tpu.memory_space<vmem>>) attributes {dimension_semantics = [#tpu.dimension_semantics<parallel>, #tpu.dimension_semantics<parallel>], iteration_bounds = array<i64: 2, 1>, scalar_prefetch = 0 : i64, scratch_operands = 0 : i64, tpu.core_type = #tpu.core_type<tc>, window_params = [{transform_indices = @transform_0, window_bounds = array<i64: 1, 8, 32>}, {pipeline_mode = #tpu.pipeline_mode<synchronous>, transform_indices = @transform_1, window_bounds = array<i64: 4, 32, 8>}, {pipeline_mode = #tpu.pipeline_mode<synchronous>, transform_indices = @transform_2, window_bounds = array<i64: 4, 32, 8>}, {pipeline_mode = #tpu.pipeline_mode<synchronous>, transform_indices = @transform_3, window_bounds = array<i64: 4, 1, 8>}, {pipeline_mode = #tpu.pipeline_mode<synchronous>, transform_indices = @transform_4, window_bounds = array<i64: 4, 1, 8>}, {transform_indices = @transform_5, window_bounds = array<i64: 1, 4, 8, 8>}, {transform_indices = @transform_6, window_bounds = array<i64: 1, 4, 8, 8>}]} {
    %c0 = arith.constant 0 : index
    %c0_0 = arith.constant 0 : index
    %c0_1 = arith.constant 0 : index
    %0 = vector.load %arg2[%c0, %c0_0, %c0_1] : memref<1x8x32xf32, #tpu.memory_space<vmem>>, vector<1x8x32xf32>
    %1 = vector.shape_cast %0 : vector<1x8x32xf32> to vector<8x32xf32>
    %c0_i32 = arith.constant 0 : i32
    %c4_i32 = arith.constant 4 : i32
    %2 = arith.addi %c0_i32, %c4_i32 : i32
    %c1_i32 = arith.constant 1 : i32
    scf.for %arg9 = %c0_i32 to %2 step %c1_i32  : i32 {
      %3 = arith.index_cast %arg9 : i32 to index
      %c0_3 = arith.constant 0 : index
      %c0_4 = arith.constant 0 : index
      %4 = vector.load %arg3[%3, %c0_3, %c0_4] : memref<4x32x8xf32, #tpu.memory_space<vmem>>, vector<1x32x8xf32>
      %5 = vector.shape_cast %4 : vector<1x32x8xf32> to vector<32x8xf32>
      %cst = arith.constant dense<0.000000e+00> : vector<8x8xf32>
      %6 = tpu.matmul %1, %5, %cst {dimension_numbers = #tpu.dot_dimension_numbers<[1], [0], [0], [1], [0, 0, 1, 1], [], []>} : vector<8x32xf32>, vector<32x8xf32>, vector<8x8xf32> -> vector<8x8xf32>
      %7 = arith.index_cast %arg9 : i32 to index
      %c0_5 = arith.constant 0 : index
      %c0_6 = arith.constant 0 : index
      %8 = vector.load %arg5[%7, %c0_5, %c0_6] : memref<4x1x8xf32, #tpu.memory_space<vmem>>, vector<1x1x8xf32>
      %9 = vector.shape_cast %8 : vector<1x1x8xf32> to vector<1x8xf32>
      %10 = vector.broadcast %9 : vector<1x8xf32> to vector<8x8xf32>
      %11 = arith.addf %6, %10 : vector<8x8xf32>
      %12 = arith.index_cast %arg9 : i32 to index
      %c0_7 = arith.constant 0 : index
      %c0_8 = arith.constant 0 : index
      %13 = vector.load %arg4[%12, %c0_7, %c0_8] : memref<4x32x8xf32, #tpu.memory_space<vmem>>, vector<1x32x8xf32>
      %14 = vector.shape_cast %13 : vector<1x32x8xf32> to vector<32x8xf32>
      %cst_9 = arith.constant dense<0.000000e+00> : vector<8x8xf32>
      %15 = tpu.matmul %1, %14, %cst_9 {dimension_numbers = #tpu.dot_dimension_numbers<[1], [0], [0], [1], [0, 0, 1, 1], [], []>} : vector<8x32xf32>, vector<32x8xf32>, vector<8x8xf32> -> vector<8x8xf32>
      %16 = arith.index_cast %arg9 : i32 to index
      %c0_10 = arith.constant 0 : index
      %c0_11 = arith.constant 0 : index
      %17 = vector.load %arg6[%16, %c0_10, %c0_11] : memref<4x1x8xf32, #tpu.memory_space<vmem>>, vector<1x1x8xf32>
      %18 = vector.shape_cast %17 : vector<1x1x8xf32> to vector<1x8xf32>
      %19 = vector.broadcast %18 : vector<1x8xf32> to vector<8x8xf32>
      %20 = arith.addf %15, %19 : vector<8x8xf32>
      %c0_12 = arith.constant 0 : index
      %21 = arith.index_cast %arg9 : i32 to index
      %c0_13 = arith.constant 0 : index
      %c0_14 = arith.constant 0 : index
      %22 = vector.load %arg7[%c0_12, %21, %c0_13, %c0_14] : memref<1x4x8x8xf32, #tpu.memory_space<vmem>>, vector<1x1x8x8xf32>
      %23 = vector.shape_cast %22 : vector<1x1x8x8xf32> to vector<8x8xf32>
      %24 = vector.shape_cast %11 : vector<8x8xf32> to vector<1x1x8x8xf32>
      tpu.vector_store %arg7[%c0_12, %21, %c0_13, %c0_14], %24 {strides = array<i32>} : memref<1x4x8x8xf32, #tpu.memory_space<vmem>>, vector<1x1x8x8xf32>,
      %c0_15 = arith.constant 0 : index
      %25 = arith.index_cast %arg9 : i32 to index
      %c0_16 = arith.constant 0 : index
      %c0_17 = arith.constant 0 : index
      %26 = vector.load %arg8[%c0_15, %25, %c0_16, %c0_17] : memref<1x4x8x8xf32, #tpu.memory_space<vmem>>, vector<1x1x8x8xf32>
      %27 = vector.shape_cast %26 : vector<1x1x8x8xf32> to vector<8x8xf32>
      %28 = vector.shape_cast %20 : vector<8x8xf32> to vector<1x1x8x8xf32>
      tpu.vector_store %arg8[%c0_15, %25, %c0_16, %c0_17], %28 {strides = array<i32>} : memref<1x4x8x8xf32, #tpu.memory_space<vmem>>, vector<1x1x8x8xf32>,
    }
    %c4_i32_2 = arith.constant 4 : i32
    return
  }
  func.func @transform_0(%arg0: i32, %arg1: i32) -> (i32, i32, i32) {
    %c0_i32 = arith.constant 0 : i32
    %c0_i32_0 = arith.constant 0 : i32
    return %arg0, %arg1, %c0_i32 : i32, i32, i32
  }
  func.func @transform_1(%arg0: i32, %arg1: i32) -> (i32, i32, i32) {
    %c0_i32 = arith.constant 0 : i32
    %c0_i32_0 = arith.constant 0 : i32
    %c0_i32_1 = arith.constant 0 : i32
    %c0_i32_2 = arith.constant 0 : i32
    return %c0_i32, %c0_i32_0, %c0_i32_1 : i32, i32, i32
  }
  func.func @transform_2(%arg0: i32, %arg1: i32) -> (i32, i32, i32) {
    %c0_i32 = arith.constant 0 : i32
    %c0_i32_0 = arith.constant 0 : i32
    %c0_i32_1 = arith.constant 0 : i32
    %c0_i32_2 = arith.constant 0 : i32
    return %c0_i32, %c0_i32_0, %c0_i32_1 : i32, i32, i32
  }
  func.func @transform_3(%arg0: i32, %arg1: i32) -> (i32, i32, i32) {
    %c0_i32 = arith.constant 0 : i32
    %c0_i32_0 = arith.constant 0 : i32
    %c0_i32_1 = arith.constant 0 : i32
    %c0_i32_2 = arith.constant 0 : i32
    return %c0_i32, %c0_i32_0, %c0_i32_1 : i32, i32, i32
  }
  func.func @transform_4(%arg0: i32, %arg1: i32) -> (i32, i32, i32) {
    %c0_i32 = arith.constant 0 : i32
    %c0_i32_0 = arith.constant 0 : i32
    %c0_i32_1 = arith.constant 0 : i32
    %c0_i32_2 = arith.constant 0 : i32
    return %c0_i32, %c0_i32_0, %c0_i32_1 : i32, i32, i32
  }
  func.func @transform_5(%arg0: i32, %arg1: i32) -> (i32, i32, i32, i32) {
    %c0_i32 = arith.constant 0 : i32
    %c0_i32_0 = arith.constant 0 : i32
    %c0_i32_1 = arith.constant 0 : i32
    return %arg0, %c0_i32, %arg1, %c0_i32_0 : i32, i32, i32, i32
  }
  func.func @transform_6(%arg0: i32, %arg1: i32) -> (i32, i32, i32, i32) {
    %c0_i32 = arith.constant 0 : i32
    %c0_i32_0 = arith.constant 0 : i32
    %c0_i32_1 = arith.constant 0 : i32
    return %arg0, %c0_i32, %arg1, %c0_i32_0 : i32, i32, i32, i32
  }
}

module attributes {stable_mosaic.version = 11 : i64} {
  func.func @_kv_proj_kernel(%arg0: i32, %arg1: i32, %arg2: memref<1x8x32xf32, #tpu.memory_space<vmem>>, %arg3: memref<4x32x8xf32, #tpu.memory_space<vmem>>, %arg4: memref<4x32x8xf32, #tpu.memory_space<vmem>>, %arg5: memref<4x1x8xf32, #tpu.memory_space<vmem>>, %arg6: memref<4x1x8xf32, #tpu.memory_space<vmem>>, %arg7: memref<1x4x8x8xf32, #tpu.memory_space<vmem>>, %arg8: memref<1x4x8x8xf32, #tpu.memory_space<vmem>>) attributes {dimension_semantics = [#tpu.dimension_semantics<parallel>, #tpu.dimension_semantics<parallel>], iteration_bounds = array<i64: 2, 1>, scalar_prefetch = 0 : i64, scratch_operands = 0 : i64, tpu.core_type = #tpu.core_type<tc>, window_params = [{transform_indices = @transform_0, window_bounds = array<i64: 1, 8, 32>}, {pipeline_mode = #tpu.pipeline_mode<synchronous>, transform_indices = @transform_1, window_bounds = array<i64: 4, 32, 8>}, {pipeline_mode = #tpu.pipeline_mode<synchronous>, transform_indices = @transform_2, window_bounds = array<i64: 4, 32, 8>}, {pipeline_mode = #tpu.pipeline_mode<synchronous>, transform_indices = @transform_3, window_bounds = array<i64: 4, 1, 8>}, {pipeline_mode = #tpu.pipeline_mode<synchronous>, transform_indices = @transform_4, window_bounds = array<i64: 4, 1, 8>}, {transform_indices = @transform_5, window_bounds = array<i64: 1, 4, 8, 8>}, {transform_indices = @transform_6, window_bounds = array<i64: 1, 4, 8, 8>}]} {
    %c0 = arith.constant 0 : index
    %c0_0 = arith.constant 0 : index
    %c0_1 = arith.constant 0 : index
    %0 = vector.load %arg2[%c0, %c0_0, %c0_1] : memref<1x8x32xf32, #tpu.memory_space<vmem>>, vector<1x8x32xf32>
    %1 = vector.shape_cast %0 : vector<1x8x32xf32> to vector<8x32xf32>
    %c0_i32 = arith.constant 0 : i32
    %c4_i32 = arith.constant 4 : i32
    %2 = arith.addi %c0_i32, %c4_i32 : i32
    %c1_i32 = arith.constant 1 : i32
    scf.for %arg9 = %c0_i32 to %2 step %c1_i32  : i32 {
      %3 = arith.index_cast %arg9 : i32 to index
      %c0_3 = arith.constant 0 : index
      %c0_4 = arith.constant 0 : index
      %4 = vector.load %arg3[%3, %c0_3, %c0_4] : memref<4x32x8xf32, #tpu.memory_space<vmem>>, vector<1x32x8xf32>
      %5 = vector.shape_cast %4 : vector<1x32x8xf32> to vector<32x8xf32>
      %cst = arith.constant dense<0.000000e+00> : vector<8x8xf32>
      %6 = tpu.matmul %1, %5, %cst {dimension_numbers = #tpu.dot_dimension_numbers<[1], [0], [0], [1], [0, 0, 1, 1], [], []>} : vector<8x32xf32>, vector<32x8xf32>, vector<8x8xf32> -> vector<8x8xf32>
      %7 = arith.index_cast %arg9 : i32 to index
      %c0_5 = arith.constant 0 : index
      %c0_6 = arith.constant 0 : index
      %8 = vector.load %arg5[%7, %c0_5, %c0_6] : memref<4x1x8xf32, #tpu.memory_space<vmem>>, vector<1x1x8xf32>
      %9 = vector.shape_cast %8 : vector<1x1x8xf32> to vector<1x8xf32>
      %10 = vector.broadcast %9 : vector<1x8xf32> to vector<8x8xf32>
      %11 = arith.addf %6, %10 : vector<8x8xf32>
      %12 = arith.index_cast %arg9 : i32 to index
      %c0_7 = arith.constant 0 : index
      %c0_8 = arith.constant 0 : index
      %13 = vector.load %arg4[%12, %c0_7, %c0_8] : memref<4x32x8xf32, #tpu.memory_space<vmem>>, vector<1x32x8xf32>
      %14 = vector.shape_cast %13 : vector<1x32x8xf32> to vector<32x8xf32>
      %cst_9 = arith.constant dense<0.000000e+00> : vector<8x8xf32>
      %15 = tpu.matmul %1, %14, %cst_9 {dimension_numbers = #tpu.dot_dimension_numbers<[1], [0], [0], [1], [0, 0, 1, 1], [], []>} : vector<8x32xf32>, vector<32x8xf32>, vector<8x8xf32> -> vector<8x8xf32>
      %16 = arith.index_cast %arg9 : i32 to index
      %c0_10 = arith.constant 0 : index
      %c0_11 = arith.constant 0 : index
      %17 = vector.load %arg6[%16, %c0_10, %c0_11] : memref<4x1x8xf32, #tpu.memory_space<vmem>>, vector<1x1x8xf32>
      %18 = vector.shape_cast %17 : vector<1x1x8xf32> to vector<1x8xf32>
      %19 = vector.broadcast %18 : vector<1x8xf32> to vector<8x8xf32>
      %20 = arith.addf %15, %19 : vector<8x8xf32>
      %c0_12 = arith.constant 0 : index
      %21 = arith.index_cast %arg9 : i32 to index
      %c0_13 = arith.constant 0 : index
      %c0_14 = arith.constant 0 : index
      %22 = vector.load %arg7[%c0_12, %21, %c0_13, %c0_14] : memref<1x4x8x8xf32, #tpu.memory_space<vmem>>, vector<1x1x8x8xf32>
      %23 = vector.shape_cast %22 : vector<1x1x8x8xf32> to vector<8x8xf32>
      %24 = vector.shape_cast %11 : vector<8x8xf32> to vector<1x1x8x8xf32>
      tpu.vector_store %arg7[%c0_12, %21, %c0_13, %c0_14], %24 {strides = array<i32>} : memref<1x4x8x8xf32, #tpu.memory_space<vmem>>, vector<1x1x8x8xf32>,
      %c0_15 = arith.constant 0 : index
      %25 = arith.index_cast %arg9 : i32 to index
      %c0_16 = arith.constant 0 : index
      %c0_17 = arith.constant 0 : index
      %26 = vector.load %arg8[%c0_15, %25, %c0_16, %c0_17] : memref<1x4x8x8xf32, #tpu.memory_space<vmem>>, vector<1x1x8x8xf32>
      %27 = vector.shape_cast %26 : vector<1x1x8x8xf32> to vector<8x8xf32>
      %28 = vector.shape_cast %20 : vector<8x8xf32> to vector<1x1x8x8xf32>
      tpu.vector_store %arg8[%c0_15, %25, %c0_16, %c0_17], %28 {strides = array<i32>} : memref<1x4x8x8xf32, #tpu.memory_space<vmem>>, vector<1x1x8x8xf32>,
    }
    %c4_i32_2 = arith.constant 4 : i32
    return
  }
  func.func @transform_0(%arg0: i32, %arg1: i32) -> (i32, i32, i32) {
    %c0_i32 = arith.constant 0 : i32
    %c0_i32_0 = arith.constant 0 : i32
    return %arg0, %arg1, %c0_i32 : i32, i32, i32
  }
  func.func @transform_1(%arg0: i32, %arg1: i32) -> (i32, i32, i32) {
    %c0_i32 = arith.constant 0 : i32
    %c0_i32_0 = arith.constant 0 : i32
    %c0_i32_1 = arith.constant 0 : i32
    %c0_i32_2 = arith.constant 0 : i32
    return %c0_i32, %c0_i32_0, %c0_i32_1 : i32, i32, i32
  }
  func.func @transform_2(%arg0: i32, %arg1: i32) -> (i32, i32, i32) {
    %c0_i32 = arith.constant 0 : i32
    %c0_i32_0 = arith.constant 0 : i32
    %c0_i32_1 = arith.constant 0 : i32
    %c0_i32_2 = arith.constant 0 : i32
    return %c0_i32, %c0_i32_0, %c0_i32_1 : i32, i32, i32
  }
  func.func @transform_3(%arg0: i32, %arg1: i32) -> (i32, i32, i32) {
    %c0_i32 = arith.constant 0 : i32
    %c0_i32_0 = arith.constant 0 : i32
    %c0_i32_1 = arith.constant 0 : i32
    %c0_i32_2 = arith.constant 0 : i32
    return %c0_i32, %c0_i32_0, %c0_i32_1 : i32, i32, i32
  }
  func.func @transform_4(%arg0: i32, %arg1: i32) -> (i32, i32, i32) {
    %c0_i32 = arith.constant 0 : i32
    %c0_i32_0 = arith.constant 0 : i32
    %c0_i32_1 = arith.constant 0 : i32
    %c0_i32_2 = arith.constant 0 : i32
    return %c0_i32, %c0_i32_0, %c0_i32_1 : i32, i32, i32
  }
  func.func @transform_5(%arg0: i32, %arg1: i32) -> (i32, i32, i32, i32) {
    %c0_i32 = arith.constant 0 : i32
    %c0_i32_0 = arith.constant 0 : i32
    %c0_i32_1 = arith.constant 0 : i32
    return %arg0, %c0_i32, %arg1, %c0_i32_0 : i32, i32, i32, i32
  }
  func.func @transform_6(%arg0: i32, %arg1: i32) -> (i32, i32, i32, i32) {
    %c0_i32 = arith.constant 0 : i32
    %c0_i32_0 = arith.constant 0 : i32
    %c0_i32_1 = arith.constant 0 : i32
    return %arg0, %c0_i32, %arg1, %c0_i32_0 : i32, i32, i32, i32
  }
}

</mosaic_0001>

<llo_original>
// kernel: tpu_custom_call.1
$region0: #{tpu_custom_call.1}
  #allocation0 [shape = 'u32[]', space=smem, size = 0x4, offset = 0x4, fixed_abs, tag = 'smem constant byte address 0x4 - core index']
  #allocation1 [shape = 'u32[144,128]{1,0:T(1,128)}', space=vmem, size = 0x12000, scoped, tag = 'internal scratch']
  %s0 = inlined_call_operand.vmem [shape: f32[2,8,32], index: 0, kind: input, shape index: {}]
  %s1 = inlined_call_operand.vmem [shape: f32[4,32,8], index: 1, kind: input, shape index: {}]
  %s2 = inlined_call_operand.vmem [shape: f32[4,32,8], index: 2, kind: input, shape index: {}]
  %s3 = inlined_call_operand.vmem [shape: f32[4,1,8], index: 3, kind: input, shape index: {}]
  %s4 = inlined_call_operand.vmem [shape: f32[4,1,8], index: 4, kind: input, shape index: {}]
  %s5 = inlined_call_operand.hbm [shape: f32[2,4,8,8], index: 5, kind: output, shape index: {0}]
  %s6 = inlined_call_operand.hbm [shape: f32[2,4,8,8], index: 6, kind: output, shape index: {1}]
  %7 = xla_tuple %s5, %s6
  %s8 = sld [smem:[#allocation0]]
  $region68: #{tpu_custom_call.1} parent=0
    _
  %s10 = ssub.s32 1, %s8
  %s11 = scalar_select 0, %s10, %s8
  $region1: #{tpu_custom_call.1} parent=0
    #allocation2 [shape = 'u8[32768]{0}', space=vmem, size = 0x8000, scoped, tag = 'output window, operand 0']
    #allocation3 [shape = 's32[2]{0}', space=sflag, size = 0x8, scoped, tag = 'scoped memory for tpu_custom_call.1']
    #allocation4 [shape = 'u8[32768]{0}', space=vmem, size = 0x8000, scoped, tag = 'output window, operand 1']
    #allocation5 [shape = 's32[2]{0}', space=sflag, size = 0x8, scoped, tag = 'scoped memory for tpu_custom_call.1']
    %12 = vsyncpa [#allocation3], 0
    %s13 = scalar_lea.sflag [#allocation3], 1
    %14 = vsyncpa %s13, 0
    %15 = vsyncpa [#allocation5], 0
    %s16 = scalar_lea.sflag [#allocation5], 1
    %17 = vsyncpa %s16, 0
    loop: start=0, step=1, limit=4
    $region2: #{tpu_custom_call.1} parent=1 // loop_pre_header
      _
    $region3: #{tpu_custom_call.1} parent=1 // loop_header
      %s19 = sphi 0, %s23
      %p20 = scmp.ge.s32.totalorder %s19, 4
      %s26 = sphi 0, %s38
      %s27 = sphi 0, %s34
      %s28 = sphi 0, %s26
      %s29 = sphi 0, %s27
      %s30 = sphi 0, %s28
      %s31 = sphi 0, %s29
      %s43 = sphi 0, %s45
      %s46 = sphi 0, %s43
      %s47 = sphi 0, %s46
      %s63 = sphi 0, %s47
      %s67 = sphi 0, %s67
      %s69 = sphi 0, %s67
      %s70 = sphi 0, %s69
      %s84 = sphi 0, %s70
      %s88 = sphi 0, %s88
      %s90 = sphi 0, %s88
      %s91 = sphi 0, %s90
      %s105 = sphi 0, %s91
      %s109 = sphi 0, %s109
      %s111 = sphi 0, %s109
      %s112 = sphi 0, %s111
      %s126 = sphi 0, %s112
      %s130 = sphi 0, %s130
      %s132 = sphi 0, %s130
      %s133 = sphi 0, %s132
      %s147 = sphi 0, %s133
      %s155 = sphi 0, %s157
      %s158 = sphi 0, %s155
      %s159 = sphi 0, %s158
      %s175 = sphi 0, %s159
      %s183 = sphi 0, %s185
      %s186 = sphi 0, %s183
      %s187 = sphi 0, %s186
      %s203 = sphi 0, %s187
    $region4: #{tpu_custom_call.1} parent=1 // loop_header_branch
      %22 = sbr.rel (%p20) target = $region8
    $region5: #{tpu_custom_call.1} parent=1 // loop_body
      %s24 = ssub.s32 %s19, 1
      %s25 = ssub.s32 %s19, 2
      %s32 = sadd.s32 1, %s27
      %p33 = scmp.ge.s32.totalorder %s32, 1
      %s34 = scalar_select %p33, 0, %s32
      %s35 = sadd.s32 1, %s26
      %s36 = scalar_select %p33, %s35, %s26
      %p37 = scmp.ge.s32.totalorder %s36, 2
      %s38 = scalar_select %p37, 0, %s36
      %s39 = ssub.s32 %s26, %s38
      %s40 = ssub.s32 %s27, %s34
      %s41 = sor.u32 %s39, %s40
      %p42 = scmp.eq.s32.totalorder %s41, 0
      %s44 = sadd.s32 %s43, 1
      %s45 = scalar_select %p42, %s43, %s44
      %p48 = pneg %p42
      %p49 = scmp.eq.s32.totalorder %s19, 1
      %p50 = por %p48, %p49
      %p51 = scmp.ne.s32.totalorder %s43, %s46
      %p52 = scmp.eq.s32.totalorder %s19, 0
      %p53 = por %p51, %p52
      %p54 = scmp.ne.s32.totalorder %s43, %s46
      %p55 = scmp.eq.s32.totalorder %s24, 1
      %p56 = por %p54, %p55
      %p57 = scmp.ne.s32.totalorder %s46, %s47
      %p58 = scmp.eq.s32.totalorder %s24, 0
      %p59 = por %p57, %p58
      %p60 = scmp.ne.s32.totalorder %s46, %s47
      %p61 = scmp.eq.s32.totalorder %s25, 1
      %p62 = por %p60, %p61
      %p64 = scmp.ne.s32.totalorder %s47, %s63
      %p65 = scmp.eq.s32.totalorder %s25, 0
      %p66 = por %p64, %p65
      %s68 = sadd.s32 %s67, 1
      %p71 = scmp.eq.s32.totalorder %s19, 1
      %p72 = scmp.ne.s32.totalorder %s67, %s69
      %p73 = scmp.eq.s32.totalorder %s19, 0
      %p74 = por %p72, %p73
      %p75 = scmp.ne.s32.totalorder %s67, %s69
      %p76 = scmp.eq.s32.totalorder %s24, 1
      %p77 = por %p75, %p76
      %p78 = scmp.ne.s32.totalorder %s69, %s70
      %p79 = scmp.eq.s32.totalorder %s24, 0
      %p80 = por %p78, %p79
      %p81 = scmp.ne.s32.totalorder %s69, %s70
      %p82 = scmp.eq.s32.totalorder %s25, 1
      %p83 = por %p81, %p82
      %p85 = scmp.ne.s32.totalorder %s70, %s84
      %p86 = scmp.eq.s32.totalorder %s25, 0
      %p87 = por %p85, %p86
      %s89 = sadd.s32 %s88, 1
      %p92 = scmp.eq.s32.totalorder %s19, 1
      %p93 = scmp.ne.s32.totalorder %s88, %s90
      %p94 = scmp.eq.s32.totalorder %s19, 0
      %p95 = por %p93, %p94
      %p96 = scmp.ne.s32.totalorder %s88, %s90
      %p97 = scmp.eq.s32.totalorder %s24, 1
      %p98 = por %p96, %p97
      %p99 = scmp.ne.s32.totalorder %s90, %s91
      %p100 = scmp.eq.s32.totalorder %s24, 0
      %p101 = por %p99, %p100
      %p102 = scmp.ne.s32.totalorder %s90, %s91
      %p103 = scmp.eq.s32.totalorder %s25, 1
      %p104 = por %p102, %p103
      %p106 = scmp.ne.s32.totalorder %s91, %s105
      %p107 = scmp.eq.s32.totalorder %s25, 0
      %p108 = por %p106, %p107
      %s110 = sadd.s32 %s109, 1
      %p113 = scmp.eq.s32.totalorder %s19, 1
      %p114 = scmp.ne.s32.totalorder %s109, %s111
      %p115 = scmp.eq.s32.totalorder %s19, 0
      %p116 = por %p114, %p115
      %p117 = scmp.ne.s32.totalorder %s109, %s111
      %p118 = scmp.eq.s32.totalorder %s24, 1
      %p119 = por %p117, %p118
      %p120 = scmp.ne.s32.totalorder %s111, %s112
      %p121 = scmp.eq.s32.totalorder %s24, 0
      %p122 = por %p120, %p121
      %p123 = scmp.ne.s32.totalorder %s111, %s112
      %p124 = scmp.eq.s32.totalorder %s25, 1
      %p125 = por %p123, %p124
      %p127 = scmp.ne.s32.totalorder %s112, %s126
      %p128 = scmp.eq.s32.totalorder %s25, 0
      %p129 = por %p127, %p128
      %s131 = sadd.s32 %s130, 1
      %p134 = scmp.eq.s32.totalorder %s19, 1
      %p135 = scmp.ne.s32.totalorder %s130, %s132
      %p136 = scmp.eq.s32.totalorder %s19, 0
      %p137 = por %p135, %p136
      %p138 = scmp.ne.s32.totalorder %s130, %s132
      %p139 = scmp.eq.s32.totalorder %s24, 1
      %p140 = por %p138, %p139
      %p141 = scmp.ne.s32.totalorder %s132, %s133
      %p142 = scmp.eq.s32.totalorder %s24, 0
      %p143 = por %p141, %p142
      %p144 = scmp.ne.s32.totalorder %s132, %s133
      %p145 = scmp.eq.s32.totalorder %s25, 1
      %p146 = por %p144, %p145
      %p148 = scmp.ne.s32.totalorder %s133, %s147
      %p149 = scmp.eq.s32.totalorder %s25, 0
      %p150 = por %p148, %p149
      %s151 = ssub.s32 %s26, %s38
      %s152 = ssub.s32 %s27, %s34
      %s153 = sor.u32 %s151, %s152
      %p154 = scmp.eq.s32.totalorder %s153, 0
      %s156 = sadd.s32 %s155, 1
      %s157 = scalar_select %p154, %s155, %s156
      %p160 = pneg %p154
      %p161 = scmp.eq.s32.totalorder %s19, 1
      %p162 = por %p160, %p161
      %p163 = scmp.ne.s32.totalorder %s155, %s158
      %p164 = scmp.eq.s32.totalorder %s19, 0
      %p165 = por %p163, %p164
      %p166 = scmp.ne.s32.totalorder %s155, %s158
      %p167 = scmp.eq.s32.totalorder %s24, 1
      %p168 = por %p166, %p167
      %p169 = scmp.ne.s32.totalorder %s158, %s159
      %p170 = scmp.eq.s32.totalorder %s24, 0
      %p171 = por %p169, %p170
      %p172 = scmp.ne.s32.totalorder %s158, %s159
      %p173 = scmp.eq.s32.totalorder %s25, 1
      %p174 = por %p172, %p173
      %p176 = scmp.ne.s32.totalorder %s159, %s175
      %p177 = scmp.eq.s32.totalorder %s25, 0
      %p178 = por %p176, %p177
      %s179 = ssub.s32 %s26, %s38
      %s180 = ssub.s32 %s27, %s34
      %s181 = sor.u32 %s179, %s180
      %p182 = scmp.eq.s32.totalorder %s181, 0
      %s184 = sadd.s32 %s183, 1
      %s185 = scalar_select %p182, %s183, %s184
      %p188 = pneg %p182
      %p189 = scmp.eq.s32.totalorder %s19, 1
      %p190 = por %p188, %p189
      %p191 = scmp.ne.s32.totalorder %s183, %s186
      %p192 = scmp.eq.s32.totalorder %s19, 0
      %p193 = por %p191, %p192
      %p194 = scmp.ne.s32.totalorder %s183, %s186
      %p195 = scmp.eq.s32.totalorder %s24, 1
      %p196 = por %p194, %p195
      %p197 = scmp.ne.s32.totalorder %s186, %s187
      %p198 = scmp.eq.s32.totalorder %s24, 0
      %p199 = por %p197, %p198
      %p200 = scmp.ne.s32.totalorder %s186, %s187
      %p201 = scmp.eq.s32.totalorder %s25, 1
      %p202 = por %p200, %p201
      %p204 = scmp.ne.s32.totalorder %s187, %s203
      %p205 = scmp.eq.s32.totalorder %s25, 0
      %p206 = por %p204, %p205
      %p207 = scmp.le.s32.totalorder 1, %s19
      %p208 = scmp.lt.s32.totalorder %s19, 3
      %p209 = pnand %p207, %p208
      %p210 = pneg %p209
      // Predicated region
      $region9: #{tpu_custom_call.1} parent=5 // pred_check
        _
      $region10: #{tpu_custom_call.1} parent=5 // pred_check_branch
        %212 = sbr.rel (%p209) target = $region12
      $region11: #{tpu_custom_call.1} parent=5 // pred_region
        %s213 = ssub.s32 %s19, 1
        // Predicated region
        $region13: #{tpu_custom_call.1} parent=11 // pred_check
          %p214 = pneg %p80
        $region14: #{tpu_custom_call.1} parent=11 // pred_check_branch
          %216 = sbr.rel (%p214) target = $region16
        $region15: #{tpu_custom_call.1} parent=11 // pred_region
          _
        $region16: #{tpu_custom_call.1} parent=11 // pred_fallthru
          _
        // Predicated region
        $region17: #{tpu_custom_call.1} parent=11 // pred_check
          %p217 = pneg %p101
        $region18: #{tpu_custom_call.1} parent=11 // pred_check_branch
          %219 = sbr.rel (%p217) target = $region20
        $region19: #{tpu_custom_call.1} parent=11 // pred_region
          _
        $region20: #{tpu_custom_call.1} parent=11 // pred_fallthru
          _
        // Predicated region
        $region21: #{tpu_custom_call.1} parent=11 // pred_check
          %p220 = pneg %p122
        $region22: #{tpu_custom_call.1} parent=11 // pred_check_branch
          %222 = sbr.rel (%p220) target = $region24
        $region23: #{tpu_custom_call.1} parent=11 // pred_region
          _
        $region24: #{tpu_custom_call.1} parent=11 // pred_fallthru
          _
        // Predicated region
        $region25: #{tpu_custom_call.1} parent=11 // pred_check
          %p223 = pneg %p143
        $region26: #{tpu_custom_call.1} parent=11 // pred_check_branch
          %225 = sbr.rel (%p223) target = $region28
        $region27: #{tpu_custom_call.1} parent=11 // pred_region
          _
        $region28: #{tpu_custom_call.1} parent=11 // pred_fallthru
          _
      $region12: #{tpu_custom_call.1} parent=5 // pred_fallthru
        _
      %p226 = scmp.lt.s32.totalorder %s19, 2
      // Predicated region
      $region29: #{tpu_custom_call.1} parent=5 // pred_check
        %p227 = pneg %p226
      $region30: #{tpu_custom_call.1} parent=5 // pred_check_branch
        %229 = sbr.rel (%p227) target = $region32
      $region31: #{tpu_custom_call.1} parent=5 // pred_region
        // Predicated region
        $region33: #{tpu_custom_call.1} parent=31 // pred_check
          %p230 = pneg %p53
        $region34: #{tpu_custom_call.1} parent=31 // pred_check_branch
          %232 = sbr.rel (%p230) target = $region36
        $region35: #{tpu_custom_call.1} parent=31 // pred_region
          %p233 = scmp.lt.s32.totalorder %s26, 1
          %s234 = scalar_select %p233, %s26, 1
          %p235 = scmp.lt.s32.totalorder %s27, 0
          %s236 = scalar_select %p235, %s27, 0
          %s237 = sadd.s32 %s236, %s234
          %s238 = smul.addr %s237, 8
          %s239 = scalar_lea.vmem %s0, %s238
        $region36: #{tpu_custom_call.1} parent=31 // pred_fallthru
          _
      $region32: #{tpu_custom_call.1} parent=5 // pred_fallthru
        _
      %p240 = scmp.le.s32.totalorder 1, %s19
      %p241 = scmp.lt.s32.totalorder %s19, 3
      %p242 = pnand %p240, %p241
      %p243 = pneg %p242
      // Predicated region
      $region37: #{tpu_custom_call.1} parent=5 // pred_check
        _
      $region38: #{tpu_custom_call.1} parent=5 // pred_check_branch
        %245 = sbr.rel (%p242) target = $region40
      $region39: #{tpu_custom_call.1} parent=5 // pred_region
        %s246 = ssub.s32 %s19, 1
        %p247 = scmp.lt.s32.totalorder %s28, 1
        %s248 = scalar_select %p247, %s28, 1
        %p249 = scmp.lt.s32.totalorder %s29, 0
        %s250 = scalar_select %p249, %s29, 0
        %s251 = sadd.s32 %s250, %s248
        %s252 = smul.addr %s251, 8
        %s253 = scalar_lea.vmem %s0, %s252
        %p254 = pneg %p59
        %p255 = pneg %p56
        %p256 = pneg %p80
        %p257 = pneg %p77
        %p258 = pneg %p101
        %p259 = pneg %p98
        %p260 = pneg %p122
        %p261 = pneg %p119
        %p262 = pneg %p143
        %p263 = pneg %p140
        %p264 = pneg %p171
        %p265 = pneg %p168
        %s266 = sand.u32 %s158, 1
        %s267 = scalar_lea.sflag [#allocation3], %s266
        %s268 = sand.u32 %s158, 1
        %s269 = smul.addr %s268, 32
        %s270 = scalar_lea.vmem [#allocation2], %s269
        %p271 = pneg %p199
        %p272 = pneg %p196
        %s273 = sand.u32 %s186, 1
        %s274 = scalar_lea.sflag [#allocation5], %s273
        %s275 = sand.u32 %s186, 1
        %s276 = smul.addr %s275, 32
        %s277 = scalar_lea.vmem [#allocation4], %s276
        %p278 = scmp.lt.s32.totalorder %s28, 1
        %s279 = scalar_select %p278, %s28, 1
        %p280 = scmp.lt.s32.totalorder %s29, 0
        %s281 = scalar_select %p280, %s29, 0
        %s282 = sadd.s32 %s281, %s279
        %s283 = smul.addr %s282, 8
        %s284 = scalar_lea.vmem %s0, %s283
        %v285 = vld [vmem:[%s284] sm:$0xff]
        loop: start=0, step=1, limit=4
        $region41: #{tpu_custom_call.1} parent=39 // loop_pre_header
          _
        $region42: #{tpu_custom_call.1} parent=39 // loop_header
          %s287 = sphi 0, %s291
          %p288 = scmp.ge.s32.totalorder %s287, 4
        $region43: #{tpu_custom_call.1} parent=39 // loop_header_branch
          %290 = sbr.rel (%p288) target = $region47
        $region44: #{tpu_custom_call.1} parent=39 // loop_body
          %s292 = smul.u32 %s287, 32
          %s293 = scalar_lea.vmem %s1, %s292
          %v294 = vld [vmem:[%s293] sm:$0xff]
          %v295 = vld [vmem:[%s293 + $0x8] sm:$0xff]
          %v296 = vld [vmem:[%s293 + $0x10] sm:$0xff]
          %v297 = vld [vmem:[%s293 + $0x18] sm:$0xff]
          %s298 = scalar_lea.vmem %s3, %s287
          %v299 = vld [vmem:[%s298] sm:$0x1]
          %v301 = vlaneseq
          %v302 = vshrl.u32 %v301, 7
          %v303 = vsub.s32 0, %v302
          %v304 = vrot.slane %v299, %v303
          %vm306 = vcmask 261120
          %v308 = vsel %vm306, %v285, 0
          %310 = vmatprep.subr.mxu0 0.0
          %311 = vmatpush1.msra.mxu0 %v294
          %312 = vmatprep.subr.mxu0 0.0
          %313 = vmatpush1.msra.mxu0 %v295
          %314 = vmatprep.subr.mxu0 0.0
          %315 = vmatpush1.msra.mxu0 %v296
          %316 = vmatprep.subr.mxu0 0.0
          %317 = vmatpush1.msra.mxu0 %v297
          %318 = vmatprep.subr.mxu0 0.0
          %319 = vmatpush1.msra.mxu0 0.0
          %320 = vmatprep.subr.mxu0 0.0
          %321 = vmatpush1.msra.mxu0 0.0
          %322 = vmatprep.subr.mxu0 0.0
          %323 = vmatpush1.msra.mxu0 0.0
          %324 = vmatprep.subr.mxu0 0.0
          %325 = vmatpush1.msra.mxu0 0.0
          %326 = vmatprep.subr.mxu0 0.0
          %327 = vmatpush1.msra.mxu0 0.0
          %328 = vmatprep.subr.mxu0 0.0
          %329 = vmatpush1.msra.mxu0 0.0
          %330 = vmatprep.subr.mxu0 0.0
          %331 = vmatpush1.msra.mxu0 0.0
          %332 = vmatprep.subr.mxu0 0.0
          %333 = vmatpush1.msra.mxu0 0.0
          %334 = vmatprep.subr.mxu0 0.0
          %335 = vmatpush1.msra.mxu0 0.0
          %336 = vmatprep.subr.mxu0 0.0
          %337 = vmatpush1.msra.mxu0 0.0
          %338 = vmatprep.subr.mxu0 0.0
          %339 = vmatpush1.msra.mxu0 0.0
          %340 = vmatprep.subr.mxu0 0.0
          %341 = vmatpush1.msra.mxu0 0.0
          %342 = vmatprep.subr.mxu0 0.0
          %343 = vmatpush1.msra.mxu0 0.0
          %344 = vmatprep.subr.mxu0 0.0
          %345 = vmatpush1.msra.mxu0 0.0
          %346 = vmatprep.subr.mxu0 0.0
          %347 = vmatpush1.msra.mxu0 0.0
          %348 = vmatprep.subr.mxu0 0.0
          %349 = vmatpush1.msra.mxu0 0.0
          %350 = vmatprep.subr.mxu0 0.0
          %351 = vmatpush1.msra.mxu0 0.0
          %352 = vmatprep.subr.mxu0 0.0
          %353 = vmatpush1.msra.mxu0 0.0
          %354 = vmatprep.subr.mxu0 0.0
          %355 = vmatpush1.msra.mxu0 0.0
          %356 = vmatprep.subr.mxu0 0.0
          %357 = vmatpush1.msra.mxu0 0.0
          %358 = vmatprep.subr.mxu0 0.0
          %359 = vmatpush1.msra.mxu0 0.0
          %360 = vmatprep.subr.mxu0 0.0
          %361 = vmatpush1.msra.mxu0 0.0
          %362 = vmatprep.subr.mxu0 0.0
          %363 = vmatpush1.msra.mxu0 0.0
          %364 = vmatprep.subr.mxu0 0.0
          %365 = vmatpush1.msra.mxu0 0.0
          %366 = vmatprep.subr.mxu0 0.0
          %367 = vmatpush1.msra.mxu0 0.0
          %368 = vmatprep.subr.mxu0 0.0
          %369 = vmatpush1.msra.mxu0 0.0
          %370 = vmatprep.subr.mxu0 0.0
          %371 = vmatpush1.msra.mxu0 0.0
          %372 = vmatprep.subr.mxu0 0.0
          %373 = vmatpush1.msra.mxu0 0.0
          %374 = vmatprep.mubr.f32.mxu0 0.0
          %375 = vmatmul.mubr.f32.gmra.mrb[0].mxu0 %v308
          %v376 = vpop.f32.mrb[0].mxu0
          %v377 = vadd.f32 %v304, %v376
          %v378 = vpop.f32.mrb[0].mxu0
          %379 = vdwg.mxu0
          %s380 = scalar_lea.vmem %s2, %s292
          %v381 = vld [vmem:[%s380] sm:$0xff]
          %v382 = vld [vmem:[%s380 + $0x8] sm:$0xff]
          %v383 = vld [vmem:[%s380 + $0x10] sm:$0xff]
          %v384 = vld [vmem:[%s380 + $0x18] sm:$0xff]
          %s385 = scalar_lea.vmem %s4, %s287
          %v386 = vld [vmem:[%s385] sm:$0x1]
          %v388 = vlaneseq
          %v389 = vshrl.u32 %v388, 7
          %v390 = vsub.s32 0, %v389
          %v391 = vrot.slane %v386, %v390
          %393 = vmatprep.subr.mxu0 0.0
          %394 = vmatpush1.msra.mxu0 %v381
          %395 = vmatprep.subr.mxu0 0.0
          %396 = vmatpush1.msra.mxu0 %v382
          %397 = vmatprep.subr.mxu0 0.0
          %398 = vmatpush1.msra.mxu0 %v383
          %399 = vmatprep.subr.mxu0 0.0
          %400 = vmatpush1.msra.mxu0 %v384
          %401 = vmatprep.subr.mxu0 0.0
          %402 = vmatpush1.msra.mxu0 0.0
          %403 = vmatprep.subr.mxu0 0.0
          %404 = vmatpush1.msra.mxu0 0.0
          %405 = vmatprep.subr.mxu0 0.0
          %406 = vmatpush1.msra.mxu0 0.0
          %407 = vmatprep.subr.mxu0 0.0
          %408 = vmatpush1.msra.mxu0 0.0
          %409 = vmatprep.subr.mxu0 0.0
          %410 = vmatpush1.msra.mxu0 0.0
          %411 = vmatprep.subr.mxu0 0.0
          %412 = vmatpush1.msra.mxu0 0.0
          %413 = vmatprep.subr.mxu0 0.0
          %414 = vmatpush1.msra.mxu0 0.0
          %415 = vmatprep.subr.mxu0 0.0
          %416 = vmatpush1.msra.mxu0 0.0
          %417 = vmatprep.subr.mxu0 0.0
          %418 = vmatpush1.msra.mxu0 0.0
          %419 = vmatprep.subr.mxu0 0.0
          %420 = vmatpush1.msra.mxu0 0.0
          %421 = vmatprep.subr.mxu0 0.0
          %422 = vmatpush1.msra.mxu0 0.0
          %423 = vmatprep.subr.mxu0 0.0
          %424 = vmatpush1.msra.mxu0 0.0
          %425 = vmatprep.subr.mxu0 0.0
          %426 = vmatpush1.msra.mxu0 0.0
          %427 = vmatprep.subr.mxu0 0.0
          %428 = vmatpush1.msra.mxu0 0.0
          %429 = vmatprep.subr.mxu0 0.0
          %430 = vmatpush1.msra.mxu0 0.0
          %431 = vmatprep.subr.mxu0 0.0
          %432 = vmatpush1.msra.mxu0 0.0
          %433 = vmatprep.subr.mxu0 0.0
          %434 = vmatpush1.msra.mxu0 0.0
          %435 = vmatprep.subr.mxu0 0.0
          %436 = vmatpush1.msra.mxu0 0.0
          %437 = vmatprep.subr.mxu0 0.0
          %438 = vmatpush1.msra.mxu0 0.0
          %439 = vmatprep.subr.mxu0 0.0
          %440 = vmatpush1.msra.mxu0 0.0
          %441 = vmatprep.subr.mxu0 0.0
          %442 = vmatpush1.msra.mxu0 0.0
          %443 = vmatprep.subr.mxu0 0.0
          %444 = vmatpush1.msra.mxu0 0.0
          %445 = vmatprep.subr.mxu0 0.0
          %446 = vmatpush1.msra.mxu0 0.0
          %447 = vmatprep.subr.mxu0 0.0
          %448 = vmatpush1.msra.mxu0 0.0
          %449 = vmatprep.subr.mxu0 0.0
          %450 = vmatpush1.msra.mxu0 0.0
          %451 = vmatprep.subr.mxu0 0.0
          %452 = vmatpush1.msra.mxu0 0.0
          %453 = vmatprep.subr.mxu0 0.0
          %454 = vmatpush1.msra.mxu0 0.0
          %455 = vmatprep.subr.mxu0 0.0
          %456 = vmatpush1.msra.mxu0 0.0
          %457 = vmatprep.mubr.f32.mxu0 0.0
          %458 = vmatmul.mubr.f32.gmra.mrb[0].mxu0 %v308
          %v459 = vpop.f32.mrb[0].mxu0
          %v460 = vadd.f32 %v391, %v459
          %v461 = vpop.f32.mrb[0].mxu0
          %462 = vdwg.mxu0
          %s463 = smul.u32 %s287, 8
          %s464 = scalar_lea.vmem %s270, %s463 [#allocation2]
          %vm465 = vcmask 64512
          %466 = vst.msk [vmem:[%s464] sm:$0xff] %vm465, %v377
          %s467 = scalar_lea.vmem %s277, %s463 [#allocation4]
          %468 = vst.msk [vmem:[%s467] sm:$0xff] %vm465, %v460
        $region45: #{tpu_custom_call.1} parent=39 // loop_footer
          %s291 = sadd.s32 1, %s287
        $region46: #{tpu_custom_call.1} parent=39 // loop_footer_branch
          %286 = sbr.rel target = $region42
        $region47: #{tpu_custom_call.1} parent=39 // loop_exit
          _
        %s469 = sand.u32 %s158, 1
        %s470 = scalar_lea.sflag [#allocation3], %s469
        %s471 = sand.u32 %s158, 1
        %s472 = smul.addr %s471, 32
        %s473 = scalar_lea.vmem [#allocation2], %s472
        %s474 = sand.u32 %s186, 1
        %s475 = scalar_lea.sflag [#allocation5], %s474
        %s476 = sand.u32 %s186, 1
        %s477 = smul.addr %s476, 32
        %s478 = scalar_lea.vmem [#allocation4], %s477
        // Predicated region
        $region48: #{tpu_custom_call.1} parent=39 // pred_check
          %p479 = pneg %p168
        $region49: #{tpu_custom_call.1} parent=39 // pred_check_branch
          %481 = sbr.rel (%p479) target = $region51
        $region50: #{tpu_custom_call.1} parent=39 // pred_region
          %s483 = ssub.s32 512, 512
          %484 = vsyncadd %s470, %s483
          %s485 = smul.addr %s28, 4
          %s486 = sadd.s32 %s29, %s485
          %s487 = smul.addr %s486, 128
          %s488 = scalar_lea.hbm %s5, %s487
          %s489 = sshll.u32 %s473, 4
          %s490 = int_to_ptr.vmem [resolvable:$true] %s489
          %495 = dma.vmem_to_hbm [thread:$0]  %s490, 512, %s488, %s470, 128, 128, 8
        $region51: #{tpu_custom_call.1} parent=39 // pred_fallthru
          _
        // Predicated region
        $region52: #{tpu_custom_call.1} parent=39 // pred_check
          %p496 = pneg %p196
        $region53: #{tpu_custom_call.1} parent=39 // pred_check_branch
          %498 = sbr.rel (%p496) target = $region55
        $region54: #{tpu_custom_call.1} parent=39 // pred_region
          %s500 = ssub.s32 512, 512
          %501 = vsyncadd %s475, %s500
          %s502 = smul.addr %s28, 4
          %s503 = sadd.s32 %s29, %s502
          %s504 = smul.addr %s503, 128
          %s505 = scalar_lea.hbm %s6, %s504
          %s506 = sshll.u32 %s478, 4
          %s507 = int_to_ptr.vmem [resolvable:$true] %s506
          %512 = dma.vmem_to_hbm [thread:$0]  %s507, 512, %s505, %s475, 128, 128, 8
        $region55: #{tpu_custom_call.1} parent=39 // pred_fallthru
          _
      $region40: #{tpu_custom_call.1} parent=5 // pred_fallthru
        _
      %p513 = scmp.le.s32.totalorder 2, %s19
      // Predicated region
      $region56: #{tpu_custom_call.1} parent=5 // pred_check
        %p514 = pneg %p513
      $region57: #{tpu_custom_call.1} parent=5 // pred_check_branch
        %516 = sbr.rel (%p514) target = $region59
      $region58: #{tpu_custom_call.1} parent=5 // pred_region
        %s517 = ssub.s32 %s19, 2
        // Predicated region
        $region60: #{tpu_custom_call.1} parent=58 // pred_check
          %p518 = pneg %p174
        $region61: #{tpu_custom_call.1} parent=58 // pred_check_branch
          %520 = sbr.rel (%p518) target = $region63
        $region62: #{tpu_custom_call.1} parent=58 // pred_region
          %s521 = sand.u32 %s159, 1
          %s522 = scalar_lea.sflag [#allocation3], %s521
          %s523 = sand.u32 %s159, 1
          %s524 = smul.addr %s523, 32
          %s525 = scalar_lea.vmem [#allocation2], %s524
          %526 = dma.done %s522, 512
        $region63: #{tpu_custom_call.1} parent=58 // pred_fallthru
          _
        // Predicated region
        $region64: #{tpu_custom_call.1} parent=58 // pred_check
          %p527 = pneg %p202
        $region65: #{tpu_custom_call.1} parent=58 // pred_check_branch
          %529 = sbr.rel (%p527) target = $region67
        $region66: #{tpu_custom_call.1} parent=58 // pred_region
          %s530 = sand.u32 %s187, 1
          %s531 = scalar_lea.sflag [#allocation5], %s530
          %s532 = sand.u32 %s187, 1
          %s533 = smul.addr %s532, 32
          %s534 = scalar_lea.vmem [#allocation4], %s533
          %535 = dma.done %s531, 512
        $region67: #{tpu_custom_call.1} parent=58 // pred_fallthru
          _
      $region59: #{tpu_custom_call.1} parent=5 // pred_fallthru
        _
    $region6: #{tpu_custom_call.1} parent=1 // loop_footer
      %s23 = sadd.s32 1, %s19
    $region7: #{tpu_custom_call.1} parent=1 // loop_footer_branch
      %18 = sbr.rel target = $region3
    $region8: #{tpu_custom_call.1} parent=1 // loop_exit
      _
    %536 = vsyncpa [#allocation3], 1
    %s537 = scalar_lea.sflag [#allocation3], 1
    %538 = vsyncpa %s537, 1
    %539 = vsyncpa [#allocation5], 1
    %s540 = scalar_lea.sflag [#allocation5], 1
    %541 = vsyncpa %s540, 1

// kernel: tpu_custom_call.1
$region0: #{tpu_custom_call.1}
  #allocation0 [shape = 'u32[]', space=smem, size = 0x4, offset = 0x4, fixed_abs, tag = 'smem constant byte address 0x4 - core index']
  #allocation1 [shape = 'u32[144,128]{1,0:T(1,128)}', space=vmem, size = 0x12000, scoped, tag = 'internal scratch']
  %s0 = inlined_call_operand.vmem [shape: f32[2,8,32], index: 0, kind: input, shape index: {}]
  %s1 = inlined_call_operand.vmem [shape: f32[4,32,8], index: 1, kind: input, shape index: {}]
  %s2 = inlined_call_operand.vmem [shape: f32[4,32,8], index: 2, kind: input, shape index: {}]
  %s3 = inlined_call_operand.vmem [shape: f32[4,1,8], index: 3, kind: input, shape index: {}]
  %s4 = inlined_call_operand.vmem [shape: f32[4,1,8], index: 4, kind: input, shape index: {}]
  %s5 = inlined_call_operand.hbm [shape: f32[2,4,8,8], index: 5, kind: output, shape index: {0}]
  %s6 = inlined_call_operand.hbm [shape: f32[2,4,8,8], index: 6, kind: output, shape index: {1}]
  %7 = xla_tuple %s5, %s6
  %s8 = sld [smem:[#allocation0]]
  $region68: #{tpu_custom_call.1} parent=0
    _
  %s10 = ssub.s32 1, %s8
  %s11 = scalar_select 0, %s10, %s8
  $region1: #{tpu_custom_call.1} parent=0
    #allocation2 [shape = 'u8[32768]{0}', space=vmem, size = 0x8000, scoped, tag = 'output window, operand 0']
    #allocation3 [shape = 's32[2]{0}', space=sflag, size = 0x8, scoped, tag = 'scoped memory for tpu_custom_call.1']
    #allocation4 [shape = 'u8[32768]{0}', space=vmem, size = 0x8000, scoped, tag = 'output window, operand 1']
    #allocation5 [shape = 's32[2]{0}', space=sflag, size = 0x8, scoped, tag = 'scoped memory for tpu_custom_call.1']
    %12 = vsyncpa [#allocation3], 0
    %s13 = scalar_lea.sflag [#allocation3], 1
    %14 = vsyncpa %s13, 0
    %15 = vsyncpa [#allocation5], 0
    %s16 = scalar_lea.sflag [#allocation5], 1
    %17 = vsyncpa %s16, 0
    loop: start=0, step=1, limit=4
    $region2: #{tpu_custom_call.1} parent=1 // loop_pre_header
      _
    $region3: #{tpu_custom_call.1} parent=1 // loop_header
      %s19 = sphi 0, %s23
      %p20 = scmp.ge.s32.totalorder %s19, 4
      %s26 = sphi 0, %s38
      %s27 = sphi 0, %s34
      %s28 = sphi 0, %s26
      %s29 = sphi 0, %s27
      %s30 = sphi 0, %s28
      %s31 = sphi 0, %s29
      %s43 = sphi 0, %s45
      %s46 = sphi 0, %s43
      %s47 = sphi 0, %s46
      %s63 = sphi 0, %s47
      %s67 = sphi 0, %s67
      %s69 = sphi 0, %s67
      %s70 = sphi 0, %s69
      %s84 = sphi 0, %s70
      %s88 = sphi 0, %s88
      %s90 = sphi 0, %s88
      %s91 = sphi 0, %s90
      %s105 = sphi 0, %s91
      %s109 = sphi 0, %s109
      %s111 = sphi 0, %s109
      %s112 = sphi 0, %s111
      %s126 = sphi 0, %s112
      %s130 = sphi 0, %s130
      %s132 = sphi 0, %s130
      %s133 = sphi 0, %s132
      %s147 = sphi 0, %s133
      %s155 = sphi 0, %s157
      %s158 = sphi 0, %s155
      %s159 = sphi 0, %s158
      %s175 = sphi 0, %s159
      %s183 = sphi 0, %s185
      %s186 = sphi 0, %s183
      %s187 = sphi 0, %s186
      %s203 = sphi 0, %s187
    $region4: #{tpu_custom_call.1} parent=1 // loop_header_branch
      %22 = sbr.rel (%p20) target = $region8
    $region5: #{tpu_custom_call.1} parent=1 // loop_body
      %s24 = ssub.s32 %s19, 1
      %s25 = ssub.s32 %s19, 2
      %s32 = sadd.s32 1, %s27
      %p33 = scmp.ge.s32.totalorder %s32, 1
      %s34 = scalar_select %p33, 0, %s32
      %s35 = sadd.s32 1, %s26
      %s36 = scalar_select %p33, %s35, %s26
      %p37 = scmp.ge.s32.totalorder %s36, 2
      %s38 = scalar_select %p37, 0, %s36
      %s39 = ssub.s32 %s26, %s38
      %s40 = ssub.s32 %s27, %s34
      %s41 = sor.u32 %s39, %s40
      %p42 = scmp.eq.s32.totalorder %s41, 0
      %s44 = sadd.s32 %s43, 1
      %s45 = scalar_select %p42, %s43, %s44
      %p48 = pneg %p42
      %p49 = scmp.eq.s32.totalorder %s19, 1
      %p50 = por %p48, %p49
      %p51 = scmp.ne.s32.totalorder %s43, %s46
      %p52 = scmp.eq.s32.totalorder %s19, 0
      %p53 = por %p51, %p52
      %p54 = scmp.ne.s32.totalorder %s43, %s46
      %p55 = scmp.eq.s32.totalorder %s24, 1
      %p56 = por %p54, %p55
      %p57 = scmp.ne.s32.totalorder %s46, %s47
      %p58 = scmp.eq.s32.totalorder %s24, 0
      %p59 = por %p57, %p58
      %p60 = scmp.ne.s32.totalorder %s46, %s47
      %p61 = scmp.eq.s32.totalorder %s25, 1
      %p62 = por %p60, %p61
      %p64 = scmp.ne.s32.totalorder %s47, %s63
      %p65 = scmp.eq.s32.totalorder %s25, 0
      %p66 = por %p64, %p65
      %s68 = sadd.s32 %s67, 1
      %p71 = scmp.eq.s32.totalorder %s19, 1
      %p72 = scmp.ne.s32.totalorder %s67, %s69
      %p73 = scmp.eq.s32.totalorder %s19, 0
      %p74 = por %p72, %p73
      %p75 = scmp.ne.s32.totalorder %s67, %s69
      %p76 = scmp.eq.s32.totalorder %s24, 1
      %p77 = por %p75, %p76
      %p78 = scmp.ne.s32.totalorder %s69, %s70
      %p79 = scmp.eq.s32.totalorder %s24, 0
      %p80 = por %p78, %p79
      %p81 = scmp.ne.s32.totalorder %s69, %s70
      %p82 = scmp.eq.s32.totalorder %s25, 1
      %p83 = por %p81, %p82
      %p85 = scmp.ne.s32.totalorder %s70, %s84
      %p86 = scmp.eq.s32.totalorder %s25, 0
      %p87 = por %p85, %p86
      %s89 = sadd.s32 %s88, 1
      %p92 = scmp.eq.s32.totalorder %s19, 1
      %p93 = scmp.ne.s32.totalorder %s88, %s90
      %p94 = scmp.eq.s32.totalorder %s19, 0
      %p95 = por %p93, %p94
      %p96 = scmp.ne.s32.totalorder %s88, %s90
      %p97 = scmp.eq.s32.totalorder %s24, 1
      %p98 = por %p96, %p97
      %p99 = scmp.ne.s32.totalorder %s90, %s91
      %p100 = scmp.eq.s32.totalorder %s24, 0
      %p101 = por %p99, %p100
      %p102 = scmp.ne.s32.totalorder %s90, %s91
      %p103 = scmp.eq.s32.totalorder %s25, 1
      %p104 = por %p102, %p103
      %p106 = scmp.ne.s32.totalorder %s91, %s105
      %p107 = scmp.eq.s32.totalorder %s25, 0
      %p108 = por %p106, %p107
      %s110 = sadd.s32 %s109, 1
      %p113 = scmp.eq.s32.totalorder %s19, 1
      %p114 = scmp.ne.s32.totalorder %s109, %s111
      %p115 = scmp.eq.s32.totalorder %s19, 0
      %p116 = por %p114, %p115
      %p117 = scmp.ne.s32.totalorder %s109, %s111
      %p118 = scmp.eq.s32.totalorder %s24, 1
      %p119 = por %p117, %p118
      %p120 = scmp.ne.s32.totalorder %s111, %s112
      %p121 = scmp.eq.s32.totalorder %s24, 0
      %p122 = por %p120, %p121
      %p123 = scmp.ne.s32.totalorder %s111, %s112
      %p124 = scmp.eq.s32.totalorder %s25, 1
      %p125 = por %p123, %p124
      %p127 = scmp.ne.s32.totalorder %s112, %s126
      %p128 = scmp.eq.s32.totalorder %s25, 0
      %p129 = por %p127, %p128
      %s131 = sadd.s32 %s130, 1
      %p134 = scmp.eq.s32.totalorder %s19, 1
      %p135 = scmp.ne.s32.totalorder %s130, %s132
      %p136 = scmp.eq.s32.totalorder %s19, 0
      %p137 = por %p135, %p136
      %p138 = scmp.ne.s32.totalorder %s130, %s132
      %p139 = scmp.eq.s32.totalorder %s24, 1
      %p140 = por %p138, %p139
      %p141 = scmp.ne.s32.totalorder %s132, %s133
      %p142 = scmp.eq.s32.totalorder %s24, 0
      %p143 = por %p141, %p142
      %p144 = scmp.ne.s32.totalorder %s132, %s133
      %p145 = scmp.eq.s32.totalorder %s25, 1
      %p146 = por %p144, %p145
      %p148 = scmp.ne.s32.totalorder %s133, %s147
      %p149 = scmp.eq.s32.totalorder %s25, 0
      %p150 = por %p148, %p149
      %s151 = ssub.s32 %s26, %s38
      %s152 = ssub.s32 %s27, %s34
      %s153 = sor.u32 %s151, %s152
      %p154 = scmp.eq.s32.totalorder %s153, 0
      %s156 = sadd.s32 %s155, 1
      %s157 = scalar_select %p154, %s155, %s156
      %p160 = pneg %p154
      %p161 = scmp.eq.s32.totalorder %s19, 1
      %p162 = por %p160, %p161
      %p163 = scmp.ne.s32.totalorder %s155, %s158
      %p164 = scmp.eq.s32.totalorder %s19, 0
      %p165 = por %p163, %p164
      %p166 = scmp.ne.s32.totalorder %s155, %s158
      %p167 = scmp.eq.s32.totalorder %s24, 1
      %p168 = por %p166, %p167
      %p169 = scmp.ne.s32.totalorder %s158, %s159
      %p170 = scmp.eq.s32.totalorder %s24, 0
      %p171 = por %p169, %p170
      %p172 = scmp.ne.s32.totalorder %s158, %s159
      %p173 = scmp.eq.s32.totalorder %s25, 1
      %p174 = por %p172, %p173
      %p176 = scmp.ne.s32.totalorder %s159, %s175
      %p177 = scmp.eq.s32.totalorder %s25, 0
      %p178 = por %p176, %p177
      %s179 = ssub.s32 %s26, %s38
      %s180 = ssub.s32 %s27, %s34
      %s181 = sor.u32 %s179, %s180
      %p182 = scmp.eq.s32.totalorder %s181, 0
      %s184 = sadd.s32 %s183, 1
      %s185 = scalar_select %p182, %s183, %s184
      %p188 = pneg %p182
      %p189 = scmp.eq.s32.totalorder %s19, 1
      %p190 = por %p188, %p189
      %p191 = scmp.ne.s32.totalorder %s183, %s186
      %p192 = scmp.eq.s32.totalorder %s19, 0
      %p193 = por %p191, %p192
      %p194 = scmp.ne.s32.totalorder %s183, %s186
      %p195 = scmp.eq.s32.totalorder %s24, 1
      %p196 = por %p194, %p195
      %p197 = scmp.ne.s32.totalorder %s186, %s187
      %p198 = scmp.eq.s32.totalorder %s24, 0
      %p199 = por %p197, %p198
      %p200 = scmp.ne.s32.totalorder %s186, %s187
      %p201 = scmp.eq.s32.totalorder %s25, 1
      %p202 = por %p200, %p201
      %p204 = scmp.ne.s32.totalorder %s187, %s203
      %p205 = scmp.eq.s32.totalorder %s25, 0
      %p206 = por %p204, %p205
      %p207 = scmp.le.s32.totalorder 1, %s19
      %p208 = scmp.lt.s32.totalorder %s19, 3
      %p209 = pnand %p207, %p208
      %p210 = pneg %p209
      // Predicated region
      $region9: #{tpu_custom_call.1} parent=5 // pred_check
        _
      $region10: #{tpu_custom_call.1} parent=5 // pred_check_branch
        %212 = sbr.rel (%p209) target = $region12
      $region11: #{tpu_custom_call.1} parent=5 // pred_region
        %s213 = ssub.s32 %s19, 1
        // Predicated region
        $region13: #{tpu_custom_call.1} parent=11 // pred_check
          %p214 = pneg %p80
        $region14: #{tpu_custom_call.1} parent=11 // pred_check_branch
          %216 = sbr.rel (%p214) target = $region16
        $region15: #{tpu_custom_call.1} parent=11 // pred_region
          _
        $region16: #{tpu_custom_call.1} parent=11 // pred_fallthru
          _
        // Predicated region
        $region17: #{tpu_custom_call.1} parent=11 // pred_check
          %p217 = pneg %p101
        $region18: #{tpu_custom_call.1} parent=11 // pred_check_branch
          %219 = sbr.rel (%p217) target = $region20
        $region19: #{tpu_custom_call.1} parent=11 // pred_region
          _
        $region20: #{tpu_custom_call.1} parent=11 // pred_fallthru
          _
        // Predicated region
        $region21: #{tpu_custom_call.1} parent=11 // pred_check
          %p220 = pneg %p122
        $region22: #{tpu_custom_call.1} parent=11 // pred_check_branch
          %222 = sbr.rel (%p220) target = $region24
        $region23: #{tpu_custom_call.1} parent=11 // pred_region
          _
        $region24: #{tpu_custom_call.1} parent=11 // pred_fallthru
          _
        // Predicated region
        $region25: #{tpu_custom_call.1} parent=11 // pred_check
          %p223 = pneg %p143
        $region26: #{tpu_custom_call.1} parent=11 // pred_check_branch
          %225 = sbr.rel (%p223) target = $region28
        $region27: #{tpu_custom_call.1} parent=11 // pred_region
          _
        $region28: #{tpu_custom_call.1} parent=11 // pred_fallthru
          _
      $region12: #{tpu_custom_call.1} parent=5 // pred_fallthru
        _
      %p226 = scmp.lt.s32.totalorder %s19, 2
      // Predicated region
      $region29: #{tpu_custom_call.1} parent=5 // pred_check
        %p227 = pneg %p226
      $region30: #{tpu_custom_call.1} parent=5 // pred_check_branch
        %229 = sbr.rel (%p227) target = $region32
      $region31: #{tpu_custom_call.1} parent=5 // pred_region
        // Predicated region
        $region33: #{tpu_custom_call.1} parent=31 // pred_check
          %p230 = pneg %p53
        $region34: #{tpu_custom_call.1} parent=31 // pred_check_branch
          %232 = sbr.rel (%p230) target = $region36
        $region35: #{tpu_custom_call.1} parent=31 // pred_region
          %p233 = scmp.lt.s32.totalorder %s26, 1
          %s234 = scalar_select %p233, %s26, 1
          %p235 = scmp.lt.s32.totalorder %s27, 0
          %s236 = scalar_select %p235, %s27, 0
          %s237 = sadd.s32 %s236, %s234
          %s238 = smul.addr %s237, 8
          %s239 = scalar_lea.vmem %s0, %s238
        $region36: #{tpu_custom_call.1} parent=31 // pred_fallthru
          _
      $region32: #{tpu_custom_call.1} parent=5 // pred_fallthru
        _
      %p240 = scmp.le.s32.totalorder 1, %s19
      %p241 = scmp.lt.s32.totalorder %s19, 3
      %p242 = pnand %p240, %p241
      %p243 = pneg %p242
      // Predicated region
      $region37: #{tpu_custom_call.1} parent=5 // pred_check
        _
      $region38: #{tpu_custom_call.1} parent=5 // pred_check_branch
        %245 = sbr.rel (%p242) target = $region40
      $region39: #{tpu_custom_call.1} parent=5 // pred_region
        %s246 = ssub.s32 %s19, 1
        %p247 = scmp.lt.s32.totalorder %s28, 1
        %s248 = scalar_select %p247, %s28, 1
        %p249 = scmp.lt.s32.totalorder %s29, 0
        %s250 = scalar_select %p249, %s29, 0
        %s251 = sadd.s32 %s250, %s248
        %s252 = smul.addr %s251, 8
        %s253 = scalar_lea.vmem %s0, %s252
        %p254 = pneg %p59
        %p255 = pneg %p56
        %p256 = pneg %p80
        %p257 = pneg %p77
        %p258 = pneg %p101
        %p259 = pneg %p98
        %p260 = pneg %p122
        %p261 = pneg %p119
        %p262 = pneg %p143
        %p263 = pneg %p140
        %p264 = pneg %p171
        %p265 = pneg %p168
        %s266 = sand.u32 %s158, 1
        %s267 = scalar_lea.sflag [#allocation3], %s266
        %s268 = sand.u32 %s158, 1
        %s269 = smul.addr %s268, 32
        %s270 = scalar_lea.vmem [#allocation2], %s269
        %p271 = pneg %p199
        %p272 = pneg %p196
        %s273 = sand.u32 %s186, 1
        %s274 = scalar_lea.sflag [#allocation5], %s273
        %s275 = sand.u32 %s186, 1
        %s276 = smul.addr %s275, 32
        %s277 = scalar_lea.vmem [#allocation4], %s276
        %p278 = scmp.lt.s32.totalorder %s28, 1
        %s279 = scalar_select %p278, %s28, 1
        %p280 = scmp.lt.s32.totalorder %s29, 0
        %s281 = scalar_select %p280, %s29, 0
        %s282 = sadd.s32 %s281, %s279
        %s283 = smul.addr %s282, 8
        %s284 = scalar_lea.vmem %s0, %s283
        %v285 = vld [vmem:[%s284] sm:$0xff]
        loop: start=0, step=1, limit=4
        $region41: #{tpu_custom_call.1} parent=39 // loop_pre_header
          _
        $region42: #{tpu_custom_call.1} parent=39 // loop_header
          %s287 = sphi 0, %s291
          %p288 = scmp.ge.s32.totalorder %s287, 4
        $region43: #{tpu_custom_call.1} parent=39 // loop_header_branch
          %290 = sbr.rel (%p288) target = $region47
        $region44: #{tpu_custom_call.1} parent=39 // loop_body
          %s292 = smul.u32 %s287, 32
          %s293 = scalar_lea.vmem %s1, %s292
          %v294 = vld [vmem:[%s293] sm:$0xff]
          %v295 = vld [vmem:[%s293 + $0x8] sm:$0xff]
          %v296 = vld [vmem:[%s293 + $0x10] sm:$0xff]
          %v297 = vld [vmem:[%s293 + $0x18] sm:$0xff]
          %s298 = scalar_lea.vmem %s3, %s287
          %v299 = vld [vmem:[%s298] sm:$0x1]
          %v301 = vlaneseq
          %v302 = vshrl.u32 %v301, 7
          %v303 = vsub.s32 0, %v302
          %v304 = vrot.slane %v299, %v303
          %vm306 = vcmask 261120
          %v308 = vsel %vm306, %v285, 0
          %310 = vmatprep.subr.mxu0 0.0
          %311 = vmatpush1.msra.mxu0 %v294
          %312 = vmatprep.subr.mxu0 0.0
          %313 = vmatpush1.msra.mxu0 %v295
          %314 = vmatprep.subr.mxu0 0.0
          %315 = vmatpush1.msra.mxu0 %v296
          %316 = vmatprep.subr.mxu0 0.0
          %317 = vmatpush1.msra.mxu0 %v297
          %318 = vmatprep.subr.mxu0 0.0
          %319 = vmatpush1.msra.mxu0 0.0
          %320 = vmatprep.subr.mxu0 0.0
          %321 = vmatpush1.msra.mxu0 0.0
          %322 = vmatprep.subr.mxu0 0.0
          %323 = vmatpush1.msra.mxu0 0.0
          %324 = vmatprep.subr.mxu0 0.0
          %325 = vmatpush1.msra.mxu0 0.0
          %326 = vmatprep.subr.mxu0 0.0
          %327 = vmatpush1.msra.mxu0 0.0
          %328 = vmatprep.subr.mxu0 0.0
          %329 = vmatpush1.msra.mxu0 0.0
          %330 = vmatprep.subr.mxu0 0.0
          %331 = vmatpush1.msra.mxu0 0.0
          %332 = vmatprep.subr.mxu0 0.0
          %333 = vmatpush1.msra.mxu0 0.0
          %334 = vmatprep.subr.mxu0 0.0
          %335 = vmatpush1.msra.mxu0 0.0
          %336 = vmatprep.subr.mxu0 0.0
          %337 = vmatpush1.msra.mxu0 0.0
          %338 = vmatprep.subr.mxu0 0.0
          %339 = vmatpush1.msra.mxu0 0.0
          %340 = vmatprep.subr.mxu0 0.0
          %341 = vmatpush1.msra.mxu0 0.0
          %342 = vmatprep.subr.mxu0 0.0
          %343 = vmatpush1.msra.mxu0 0.0
          %344 = vmatprep.subr.mxu0 0.0
          %345 = vmatpush1.msra.mxu0 0.0
          %346 = vmatprep.subr.mxu0 0.0
          %347 = vmatpush1.msra.mxu0 0.0
          %348 = vmatprep.subr.mxu0 0.0
          %349 = vmatpush1.msra.mxu0 0.0
          %350 = vmatprep.subr.mxu0 0.0
          %351 = vmatpush1.msra.mxu0 0.0
          %352 = vmatprep.subr.mxu0 0.0
          %353 = vmatpush1.msra.mxu0 0.0
          %354 = vmatprep.subr.mxu0 0.0
          %355 = vmatpush1.msra.mxu0 0.0
          %356 = vmatprep.subr.mxu0 0.0
          %357 = vmatpush1.msra.mxu0 0.0
          %358 = vmatprep.subr.mxu0 0.0
          %359 = vmatpush1.msra.mxu0 0.0
          %360 = vmatprep.subr.mxu0 0.0
          %361 = vmatpush1.msra.mxu0 0.0
          %362 = vmatprep.subr.mxu0 0.0
          %363 = vmatpush1.msra.mxu0 0.0
          %364 = vmatprep.subr.mxu0 0.0
          %365 = vmatpush1.msra.mxu0 0.0
          %366 = vmatprep.subr.mxu0 0.0
          %367 = vmatpush1.msra.mxu0 0.0
          %368 = vmatprep.subr.mxu0 0.0
          %369 = vmatpush1.msra.mxu0 0.0
          %370 = vmatprep.subr.mxu0 0.0
          %371 = vmatpush1.msra.mxu0 0.0
          %372 = vmatprep.subr.mxu0 0.0
          %373 = vmatpush1.msra.mxu0 0.0
          %374 = vmatprep.mubr.f32.mxu0 0.0
          %375 = vmatmul.mubr.f32.gmra.mrb[0].mxu0 %v308
          %v376 = vpop.f32.mrb[0].mxu0
          %v377 = vadd.f32 %v304, %v376
          %v378 = vpop.f32.mrb[0].mxu0
          %379 = vdwg.mxu0
          %s380 = scalar_lea.vmem %s2, %s292
          %v381 = vld [vmem:[%s380] sm:$0xff]
          %v382 = vld [vmem:[%s380 + $0x8] sm:$0xff]
          %v383 = vld [vmem:[%s380 + $0x10] sm:$0xff]
          %v384 = vld [vmem:[%s380 + $0x18] sm:$0xff]
          %s385 = scalar_lea.vmem %s4, %s287
          %v386 = vld [vmem:[%s385] sm:$0x1]
          %v388 = vlaneseq
          %v389 = vshrl.u32 %v388, 7
          %v390 = vsub.s32 0, %v389
          %v391 = vrot.slane %v386, %v390
          %393 = vmatprep.subr.mxu0 0.0
          %394 = vmatpush1.msra.mxu0 %v381
          %395 = vmatprep.subr.mxu0 0.0
          %396 = vmatpush1.msra.mxu0 %v382
          %397 = vmatprep.subr.mxu0 0.0
          %398 = vmatpush1.msra.mxu0 %v383
          %399 = vmatprep.subr.mxu0 0.0
          %400 = vmatpush1.msra.mxu0 %v384
          %401 = vmatprep.subr.mxu0 0.0
          %402 = vmatpush1.msra.mxu0 0.0
          %403 = vmatprep.subr.mxu0 0.0
          %404 = vmatpush1.msra.mxu0 0.0
          %405 = vmatprep.subr.mxu0 0.0
          %406 = vmatpush1.msra.mxu0 0.0
          %407 = vmatprep.subr.mxu0 0.0
          %408 = vmatpush1.msra.mxu0 0.0
          %409 = vmatprep.subr.mxu0 0.0
          %410 = vmatpush1.msra.mxu0 0.0
          %411 = vmatprep.subr.mxu0 0.0
          %412 = vmatpush1.msra.mxu0 0.0
          %413 = vmatprep.subr.mxu0 0.0
          %414 = vmatpush1.msra.mxu0 0.0
          %415 = vmatprep.subr.mxu0 0.0
          %416 = vmatpush1.msra.mxu0 0.0
          %417 = vmatprep.subr.mxu0 0.0
          %418 = vmatpush1.msra.mxu0 0.0
          %419 = vmatprep.subr.mxu0 0.0
          %420 = vmatpush1.msra.mxu0 0.0
          %421 = vmatprep.subr.mxu0 0.0
          %422 = vmatpush1.msra.mxu0 0.0
          %423 = vmatprep.subr.mxu0 0.0
          %424 = vmatpush1.msra.mxu0 0.0
          %425 = vmatprep.subr.mxu0 0.0
          %426 = vmatpush1.msra.mxu0 0.0
          %427 = vmatprep.subr.mxu0 0.0
          %428 = vmatpush1.msra.mxu0 0.0
          %429 = vmatprep.subr.mxu0 0.0
          %430 = vmatpush1.msra.mxu0 0.0
          %431 = vmatprep.subr.mxu0 0.0
          %432 = vmatpush1.msra.mxu0 0.0
          %433 = vmatprep.subr.mxu0 0.0
          %434 = vmatpush1.msra.mxu0 0.0
          %435 = vmatprep.subr.mxu0 0.0
          %436 = vmatpush1.msra.mxu0 0.0
          %437 = vmatprep.subr.mxu0 0.0
          %438 = vmatpush1.msra.mxu0 0.0
          %439 = vmatprep.subr.mxu0 0.0
          %440 = vmatpush1.msra.mxu0 0.0
          %441 = vmatprep.subr.mxu0 0.0
          %442 = vmatpush1.msra.mxu0 0.0
          %443 = vmatprep.subr.mxu0 0.0
          %444 = vmatpush1.msra.mxu0 0.0
          %445 = vmatprep.subr.mxu0 0.0
          %446 = vmatpush1.msra.mxu0 0.0
          %447 = vmatprep.subr.mxu0 0.0
          %448 = vmatpush1.msra.mxu0 0.0
          %449 = vmatprep.subr.mxu0 0.0
          %450 = vmatpush1.msra.mxu0 0.0
          %451 = vmatprep.subr.mxu0 0.0
          %452 = vmatpush1.msra.mxu0 0.0
          %453 = vmatprep.subr.mxu0 0.0
          %454 = vmatpush1.msra.mxu0 0.0
          %455 = vmatprep.subr.mxu0 0.0
          %456 = vmatpush1.msra.mxu0 0.0
          %457 = vmatprep.mubr.f32.mxu0 0.0
          %458 = vmatmul.mubr.f32.gmra.mrb[0].mxu0 %v308
          %v459 = vpop.f32.mrb[0].mxu0
          %v460 = vadd.f32 %v391, %v459
          %v461 = vpop.f32.mrb[0].mxu0
          %462 = vdwg.mxu0
          %s463 = smul.u32 %s287, 8
          %s464 = scalar_lea.vmem %s270, %s463 [#allocation2]
          %vm465 = vcmask 64512
          %466 = vst.msk [vmem:[%s464] sm:$0xff] %vm465, %v377
          %s467 = scalar_lea.vmem %s277, %s463 [#allocation4]
          %468 = vst.msk [vmem:[%s467] sm:$0xff] %vm465, %v460
        $region45: #{tpu_custom_call.1} parent=39 // loop_footer
          %s291 = sadd.s32 1, %s287
        $region46: #{tpu_custom_call.1} parent=39 // loop_footer_branch
          %286 = sbr.rel target = $region42
        $region47: #{tpu_custom_call.1} parent=39 // loop_exit
          _
        %s469 = sand.u32 %s158, 1
        %s470 = scalar_lea.sflag [#allocation3], %s469
        %s471 = sand.u32 %s158, 1
        %s472 = smul.addr %s471, 32
        %s473 = scalar_lea.vmem [#allocation2], %s472
        %s474 = sand.u32 %s186, 1
        %s475 = scalar_lea.sflag [#allocation5], %s474
        %s476 = sand.u32 %s186, 1
        %s477 = smul.addr %s476, 32
        %s478 = scalar_lea.vmem [#allocation4], %s477
        // Predicated region
        $region48: #{tpu_custom_call.1} parent=39 // pred_check
          %p479 = pneg %p168
        $region49: #{tpu_custom_call.1} parent=39 // pred_check_branch
          %481 = sbr.rel (%p479) target = $region51
        $region50: #{tpu_custom_call.1} parent=39 // pred_region
          %s483 = ssub.s32 512, 512
          %484 = vsyncadd %s470, %s483
          %s485 = smul.addr %s28, 4
          %s486 = sadd.s32 %s29, %s485
          %s487 = smul.addr %s486, 128
          %s488 = scalar_lea.hbm %s5, %s487
          %s489 = sshll.u32 %s473, 4
          %s490 = int_to_ptr.vmem [resolvable:$true] %s489
          %495 = dma.vmem_to_hbm [thread:$0]  %s490, 512, %s488, %s470, 128, 128, 8
        $region51: #{tpu_custom_call.1} parent=39 // pred_fallthru
          _
        // Predicated region
        $region52: #{tpu_custom_call.1} parent=39 // pred_check
          %p496 = pneg %p196
        $region53: #{tpu_custom_call.1} parent=39 // pred_check_branch
          %498 = sbr.rel (%p496) target = $region55
        $region54: #{tpu_custom_call.1} parent=39 // pred_region
          %s500 = ssub.s32 512, 512
          %501 = vsyncadd %s475, %s500
          %s502 = smul.addr %s28, 4
          %s503 = sadd.s32 %s29, %s502
          %s504 = smul.addr %s503, 128
          %s505 = scalar_lea.hbm %s6, %s504
          %s506 = sshll.u32 %s478, 4
          %s507 = int_to_ptr.vmem [resolvable:$true] %s506
          %512 = dma.vmem_to_hbm [thread:$0]  %s507, 512, %s505, %s475, 128, 128, 8
        $region55: #{tpu_custom_call.1} parent=39 // pred_fallthru
          _
      $region40: #{tpu_custom_call.1} parent=5 // pred_fallthru
        _
      %p513 = scmp.le.s32.totalorder 2, %s19
      // Predicated region
      $region56: #{tpu_custom_call.1} parent=5 // pred_check
        %p514 = pneg %p513
      $region57: #{tpu_custom_call.1} parent=5 // pred_check_branch
        %516 = sbr.rel (%p514) target = $region59
      $region58: #{tpu_custom_call.1} parent=5 // pred_region
        %s517 = ssub.s32 %s19, 2
        // Predicated region
        $region60: #{tpu_custom_call.1} parent=58 // pred_check
          %p518 = pneg %p174
        $region61: #{tpu_custom_call.1} parent=58 // pred_check_branch
          %520 = sbr.rel (%p518) target = $region63
        $region62: #{tpu_custom_call.1} parent=58 // pred_region
          %s521 = sand.u32 %s159, 1
          %s522 = scalar_lea.sflag [#allocation3], %s521
          %s523 = sand.u32 %s159, 1
          %s524 = smul.addr %s523, 32
          %s525 = scalar_lea.vmem [#allocation2], %s524
          %526 = dma.done %s522, 512
        $region63: #{tpu_custom_call.1} parent=58 // pred_fallthru
          _
        // Predicated region
        $region64: #{tpu_custom_call.1} parent=58 // pred_check
          %p527 = pneg %p202
        $region65: #{tpu_custom_call.1} parent=58 // pred_check_branch
          %529 = sbr.rel (%p527) target = $region67
        $region66: #{tpu_custom_call.1} parent=58 // pred_region
          %s530 = sand.u32 %s187, 1
          %s531 = scalar_lea.sflag [#allocation5], %s530
          %s532 = sand.u32 %s187, 1
          %s533 = smul.addr %s532, 32
          %s534 = scalar_lea.vmem [#allocation4], %s533
          %535 = dma.done %s531, 512
        $region67: #{tpu_custom_call.1} parent=58 // pred_fallthru
          _
      $region59: #{tpu_custom_call.1} parent=5 // pred_fallthru
        _
    $region6: #{tpu_custom_call.1} parent=1 // loop_footer
      %s23 = sadd.s32 1, %s19
    $region7: #{tpu_custom_call.1} parent=1 // loop_footer_branch
      %18 = sbr.rel target = $region3
    $region8: #{tpu_custom_call.1} parent=1 // loop_exit
      _
    %536 = vsyncpa [#allocation3], 1
    %s537 = scalar_lea.sflag [#allocation3], 1
    %538 = vsyncpa %s537, 1
    %539 = vsyncpa [#allocation5], 1
    %s540 = scalar_lea.sflag [#allocation5], 1
    %541 = vsyncpa %s540, 1

</llo_original>
